<compile_context>
chip_gen: v7x
topology: tpu7x:2x2x1
jax: 0.10.0
libtpu: 0.0.40
codegen_flags: <defaults>
</compile_context>

<pallas_src>
import functools

import jax
import jax.numpy as jnp
from jax.experimental import pallas as pl
from jax.experimental.pallas import tpu as pltpu

IGNORE_INDEX = -100


def _round_up(x, m):
    return (x + m - 1) // m * m


# ------------------------------ fused kernel --------------------------------
def rmtpp_fused_kernel(wb_ref,                      # SMEM (2,): [intensity_w, intensity_b]
                       h_ref,                       # [TN, H]   (native dtype)
                       w1_ref, b1_ref,              # [H, M], [1, M]
                       wh_ref, bh_ref,              # [M, Kpad], [1, Kpad]  (mark | time | zero-pad)
                       tt_ref, mt_ref, msk_ref,     # [TN,1] f32, [TN,1] i32, [TN,1] f32
                       head_ref, loss_ref,          # out: [TN, Kpad] f32, (1, 128) f32
                       acc_ref,                     # scratch: VMEM (1, 128) f32
                       *, num_marks, mxu_dtype):
    i = pl.program_id(0)
    K = num_marks
    TN, Kpad = head_ref.shape

    @pl.when(i == 0)
    def _init():
        acc_ref[...] = jnp.zeros_like(acc_ref)

    iw = wb_ref[0]                                  # intensity_w (scalar)
    ib = wb_ref[1]                                  # intensity_b (scalar)

    # ---------------- decoder: MLP + fused mark/time head -------------------
    # MXU operands in mxu_dtype (f32 default; bf16 on v6e/v7x via
    # prepare_params), accumulation in f32.  Elementwise math stays f32.
    h = h_ref[...].astype(mxu_dtype)
    z = jnp.dot(h, w1_ref[...], preferred_element_type=jnp.float32) + b1_ref[...]
    # TODO(synk): pl.reciprocal(..., approx=True) is cheaper (EUP vrcp) but
    # must be re-validated against the 1e-5 tolerance before enabling.
    mlp = pl.reciprocal(1.0 + jnp.exp(-z), approx=False)          # sigmoid

    # one MXU pass: lanes [0..K-1] = mark logits, lane K = time logit,
    # lanes > K = 0 (zero-padded weight/bias columns)
    y = jnp.dot(mlp.astype(mxu_dtype), wh_ref[...],
                preferred_element_type=jnp.float32) + bh_ref[...]

    col = jax.lax.broadcasted_iota(jnp.int32, (TN, Kpad), 1)
    is_mark = col < K

    # log_softmax over the K mark lanes only (time / pad lanes masked out)
    neg_big = jnp.float32(-1e30)
    y_m = jnp.where(is_mark, y, neg_big)
    mx = jnp.max(y_m, axis=-1, keepdims=True)                                # [TN,1]
    lse = mx + jnp.log(jnp.sum(jnp.exp(y_m - mx), axis=-1, keepdims=True))   # [TN,1]
    logp = y - lse                                                           # mark lanes valid

    # lane-dense output slab: mark log-probs | raw time logit | zeros
    head_ref[...] = jnp.where(is_mark, logp, y)

    # ------------------------------- loss -----------------------------------
    tt = tt_ref[...]                                # [TN,1] time targets
    mt = mt_ref[...]                                # [TN,1] int32 mark targets
    mask = msk_ref[...]                             # [TN,1] f32 sequence mask (0 on padding)

    # time logit per row: static lane slice of the live [TN,Kpad] tile
    tl = y[:, K:K + 1]                                                       # [TN,1]

    # time log-likelihood.  NOTE: exp() can overflow f32 for very large
    # logits/targets — inherited from the reference formula.
    ex = tl + iw * tt + ib
    integral = (1.0 / iw) * (jnp.exp(ex) - jnp.exp(tl + ib))
    time_ll = ex - integral
    t_sum = jnp.sum(time_ll * mask, axis=0, keepdims=True)                   # (1,1)

    # NLLLoss(reduction='none', ignore_index=-100): select target log-prob
    sel = jnp.sum(jnp.where(col == mt, logp, 0.0), axis=-1, keepdims=True)   # [TN,1]
    nll = jnp.where(mt == IGNORE_INDEX, 0.0, -sel)
    n_sum = jnp.sum(nll * mask, axis=0, keepdims=True)                       # (1,1)
    m_sum = jnp.sum(mask, axis=0, keepdims=True)                             # (1,1)

    # accumulate the three partial sums in one lane-dense scratch row
    # TODO(synk): for v7x 2-TC "parallel" sharding, emit per-tile partial sums
    # to a (grid, 128) output and reduce in the wrapper instead of carrying
    # this shared accumulator (which forces the N axis to be "arbitrary").
    lane = jax.lax.broadcasted_iota(jnp.int32, (1, 128), 1)
    acc_ref[...] += jnp.where(lane == 0, t_sum,
                              jnp.where(lane == 1, n_sum,
                                        jnp.where(lane == 2, m_sum, 0.0)))

    @pl.when(i == pl.num_programs(0) - 1)
    def _finalize():
        acc = acc_ref[...]
        t = acc[:, 0:1]
        n = acc[:, 1:2]
        m = acc[:, 2:3]
        # Precondition (same as the torch reference): mask.sum() > 0, else NaN.
        inv_m = pl.reciprocal(m, approx=False)
        neg_time = -t * inv_m
        mark_loss = n * inv_m
        total = neg_time + mark_loss
        # single lane-dense (1,128) loss row: [time_loss, mark_loss, total, 0...]
        loss_ref[...] = jnp.where(lane == 0, neg_time,
                                  jnp.where(lane == 1, mark_loss,
                                            jnp.where(lane == 2, total, 0.0)))


# ------------------------------ param prep -----------------------------------
def prepare_params(params, *, mxu_dtype=jnp.float32):
    """One-time fusion / padding / cast of the decoder weights.

    Keep this OUT of the per-step hot path (call once, reuse the result).
    Set mxu_dtype=jnp.bfloat16 on v6e/v7x for ~2x MXU feed rate (f32 accum).
    """
    H, M = params["w1"].shape
    K = params["wm"].shape[1]
    Kpad = _round_up(K + 1, 128)                    # lane-dense head width

    w_head = jnp.concatenate([params["wm"], params["wt"]], axis=1)          # [M, K+1]
    w_head = jnp.pad(w_head, ((0, 0), (0, Kpad - (K + 1)))).astype(mxu_dtype)
    b_head = jnp.concatenate([params["bm"], params["bt"]], axis=0)          # [K+1]
    b_head = jnp.pad(b_head, (0, Kpad - (K + 1))).reshape(1, Kpad).astype(jnp.float32)

    return {
        "w1": params["w1"].astype(mxu_dtype),
        "b1": params["b1"].reshape(1, M).astype(jnp.float32),
        "w_head": w_head,
        "b_head": b_head,
        "wb": jnp.stack([params["intensity_w"], params["intensity_b"]]).astype(jnp.float32),
    }


# -------------------------------- wrapper ------------------------------------
def rmtpp_forward_and_loss(hidden_states, prepared, time_target, mark_target,
                           sequence_length, *, num_event_types, tile_n=512):
    """Fused RMTPPDecoder forward + RMTPPLoss forward.

    Returns ((time_logits [B,S,1], mark_logits [B,S,K], base_intensity),
             (negative_time_loglikelihood, mark_loss, total_loss)).
    """
    B, S, H = hidden_states.shape
    K = num_event_types
    M = prepared["w1"].shape[1]
    Kpad = prepared["w_head"].shape[1]
    N = B * S
    mxu_dtype = prepared["w1"].dtype

    # row-tile size: >=512 when available, 8-sublane aligned
    TN = _round_up(min(tile_n, _round_up(N, 8)), 8)
    N_pad = _round_up(N, TN)
    G = N_pad // TN

    h2d = hidden_states.reshape(N, H)               # native dtype; cast in-kernel
    tt = time_target.reshape(N, 1).astype(jnp.float32)
    mt = mark_target.reshape(N, 1).astype(jnp.int32)
    # sequence mask (same as torch create_sequence_mask), flattened per row
    msk = (jnp.arange(S, dtype=jnp.int32)[None, :]
           < sequence_length.astype(jnp.int32)[:, None]).astype(jnp.float32).reshape(N, 1)

    if N_pad != N:                                  # pad rows are masked out (msk=0)
        pad = N_pad - N
        h2d = jnp.pad(h2d, ((0, pad), (0, 0)))
        tt = jnp.pad(tt, ((0, pad), (0, 0)))
        mt = jnp.pad(mt, ((0, pad), (0, 0)))
        msk = jnp.pad(msk, ((0, pad), (0, 0)))

    # explicit VMEM budget: double-buffered row tiles + weights, capped so it
    # also fits v7x's 64 MiB VMEM (halve TN there if this formula exceeds it).
    itemsize = 4
    tile_bytes = TN * (H + Kpad + 3) * itemsize
    fixed_bytes = (H * M + M + M * Kpad + Kpad + 2 * 128) * itemsize
    vmem_limit = int(min(max(4 * tile_bytes + 2 * fixed_bytes, 16 * 1024 * 1024),
                         32 * 1024 * 1024))

    cost = pl.CostEstimate(
        flops=int(2 * N_pad * H * M + 2 * N_pad * M * Kpad + 12 * N_pad * Kpad),
        transcendentals=int(N_pad * (M + Kpad + 4)),
        bytes_accessed=int(N_pad * H * jnp.dtype(h2d.dtype).itemsize
                           + 4 * N_pad * (Kpad + 3)
                           + fixed_bytes),
    )

    head, losses = pl.pallas_call(
        functools.partial(rmtpp_fused_kernel, num_marks=K, mxu_dtype=mxu_dtype),
        out_shape=(jax.ShapeDtypeStruct((N_pad, Kpad), jnp.float32),
                   jax.ShapeDtypeStruct((1, 128), jnp.float32)),
        grid=(G,),
        in_specs=[
            pl.BlockSpec(memory_space=pltpu.MemorySpace.SMEM),       # wb scalars
            pl.BlockSpec((TN, H), lambda i: (i, 0)),                 # hidden rows
            pl.BlockSpec((H, M), lambda i: (0, 0)),                  # w1
            pl.BlockSpec((1, M), lambda i: (0, 0)),                  # b1
            pl.BlockSpec((M, Kpad), lambda i: (0, 0)),               # fused head W
            pl.BlockSpec((1, Kpad), lambda i: (0, 0)),               # fused head b
            pl.BlockSpec((TN, 1), lambda i: (i, 0)),                 # time targets
            pl.BlockSpec((TN, 1), lambda i: (i, 0)),                 # mark targets
            pl.BlockSpec((TN, 1), lambda i: (i, 0)),                 # sequence mask
        ],
        out_specs=(pl.BlockSpec((TN, Kpad), lambda i: (i, 0)),       # head slab
                   pl.BlockSpec((1, 128), lambda i: (0, 0))),        # loss row (resident)
        scratch_shapes=[pltpu.VMEM((1, 128), jnp.float32)],          # loss accumulator
        compiler_params=pltpu.CompilerParams(
            # "arbitrary": the loss accumulator is carried across the N axis.
            dimension_semantics=("arbitrary",),
            vmem_limit_bytes=vmem_limit),
        cost_estimate=cost,
    )(prepared["wb"], h2d, prepared["w1"], prepared["b1"],
      prepared["w_head"], prepared["b_head"], tt, mt, msk)

    mark_logits = head[:N, :K].reshape(B, S, K)
    # NOTE: torch's loss does `.squeeze()` on time_logits; here only the last
    # axis is squeezed inside the loss math (fixes the B==1 / S==1 edge case).
    time_logits = head[:N, K:K + 1].reshape(B, S, 1)

    decoder_out = (time_logits, mark_logits, prepared["wb"][1])
    loss_out = (losses[0, 0], losses[0, 1], losses[0, 2])
    return decoder_out, loss_out


# --------------------------- pure-JAX reference ------------------------------
def reference(hidden_states, params, time_target, mark_target, seq_len):
    mlp = jax.nn.sigmoid(hidden_states @ params["w1"] + params["b1"])
    time_logits = mlp @ params["wt"] + params["bt"]                       # [B,S,1]
    mark_logits = jax.nn.log_softmax(mlp @ params["wm"] + params["bm"], axis=-1)
    w, b = params["intensity_w"], params["intensity_b"]

    tl = time_logits[..., 0]                 # squeeze last axis only
    mask = (jnp.arange(time_target.shape[1])[None, :] < seq_len[:, None]).astype(jnp.float32)
    integral = 1.0 / w * (jnp.exp(tl + w * time_target + b) - jnp.exp(tl + b))
    time_ll = tl + w * time_target + b - integral
    neg_time = -jnp.sum(time_ll * mask) / jnp.sum(mask)

    lp_flat = mark_logits.reshape(-1, mark_logits.shape[-1])
    tgt = mark_target.reshape(-1)
    nll = -jnp.take_along_axis(lp_flat, tgt[:, None], axis=1)[:, 0]
    nll = jnp.where(tgt == IGNORE_INDEX, 0.0, nll).reshape(mark_target.shape)
    mark_loss = jnp.sum(nll * mask) / jnp.sum(mask)
    return neg_time, mark_loss, neg_time + mark_loss, time_logits, mark_logits


# ----------------------------------- main ------------------------------------
if __name__ == "__main__":
    B, S, H, M, K = 2, 8, 32, 16, 8

    key = jax.random.PRNGKey(0)
    ks = jax.random.split(key, 10)
    params = {
        "w1": jax.random.normal(ks[0], (H, M), jnp.float32) * 0.1,
        "b1": jax.random.normal(ks[1], (M,), jnp.float32) * 0.1,
        "wm": jax.random.normal(ks[2], (M, K), jnp.float32) * 0.1,
        "bm": jax.random.normal(ks[3], (K,), jnp.float32) * 0.1,
        "wt": jax.random.normal(ks[4], (M, 1), jnp.float32) * 0.1,
        "bt": jax.random.normal(ks[5], (1,), jnp.float32) * 0.1,
        "intensity_w": jnp.float32(0.1),   # matches nn.Parameter(torch.tensor(0.1))
        "intensity_b": jnp.float32(0.1),
    }

    hidden_states = jax.random.normal(ks[6], (B, S, H), jnp.float32)
    time_target = jnp.abs(jax.random.normal(ks[7], (B, S), jnp.float32)) * 0.5
    mark_target = jax.random.randint(ks[8], (B, S), 0, K, jnp.int32)
    sequence_length = jnp.array([S, 5], dtype=jnp.int32)

    # one-time weight fusion / padding (outside the hot path); f32 MXU here so
    # the 1e-5 check holds — use mxu_dtype=jnp.bfloat16 on v6e/v7x in prod.
    prepared = prepare_params(params, mxu_dtype=jnp.float32)

    fwd = jax.jit(functools.partial(rmtpp_forward_and_loss, num_event_types=K))
    (time_logits, mark_logits, base_intensity), (time_loss, mark_loss, total_loss) = fwd(
        hidden_states, prepared, time_target, mark_target, sequence_length)
    total_loss = jax.block_until_ready(total_loss)

    # Numerical check against pure-JAX reference (decoder outputs + losses)
    rt, rm, rtot, r_tl, r_ml = reference(hidden_states, params, time_target,
                                         mark_target, sequence_length)
    assert jnp.allclose(time_logits, r_tl, rtol=1e-5, atol=1e-5)
    assert jnp.allclose(mark_logits, r_ml, rtol=1e-5, atol=1e-5)
    assert jnp.allclose(time_loss, rt, rtol=1e-5, atol=1e-5), (time_loss, rt)
    assert jnp.allclose(mark_loss, rm, rtol=1e-5, atol=1e-5), (mark_loss, rm)
    assert jnp.allclose(total_loss, rtot, rtol=1e-5, atol=1e-5), (total_loss, rtot)

    print("KERNEL_OK")
</pallas_src>

<mosaic_0001>
module attributes {stable_mosaic.version = 11 : i64} {
  func.func @rmtpp_fused_kernel(%arg0: i32, %arg1: memref<2xf32, #tpu.memory_space<smem>>, %arg2: memref<16x32xf32, #tpu.memory_space<vmem>>, %arg3: memref<32x16xf32, #tpu.memory_space<vmem>>, %arg4: memref<1x16xf32, #tpu.memory_space<vmem>>, %arg5: memref<16x128xf32, #tpu.memory_space<vmem>>, %arg6: memref<1x128xf32, #tpu.memory_space<vmem>>, %arg7: memref<16x1xf32, #tpu.memory_space<vmem>>, %arg8: memref<16x1xi32, #tpu.memory_space<vmem>>, %arg9: memref<16x1xf32, #tpu.memory_space<vmem>>, %arg10: memref<16x128xf32, #tpu.memory_space<vmem>>, %arg11: memref<1x128xf32, #tpu.memory_space<vmem>>, %arg12: memref<1x128xf32, #tpu.memory_space<vmem>>) attributes {dimension_semantics = [#tpu.dimension_semantics<arbitrary>], iteration_bounds = array<i64: 1>, scalar_prefetch = 0 : i64, scratch_operands = 1 : i64, tpu.core_type = #tpu.core_type<tc>, window_params = [{transform_indices = @transform_0, window_bounds = array<i64: 2>}, {transform_indices = @transform_1, window_bounds = array<i64: 16, 32>}, {pipeline_mode = #tpu.pipeline_mode<synchronous>, transform_indices = @transform_2, window_bounds = array<i64: 32, 16>}, {pipeline_mode = #tpu.pipeline_mode<synchronous>, transform_indices = @transform_3, window_bounds = array<i64: 1, 16>}, {pipeline_mode = #tpu.pipeline_mode<synchronous>, transform_indices = @transform_4, window_bounds = array<i64: 16, 128>}, {pipeline_mode = #tpu.pipeline_mode<synchronous>, transform_indices = @transform_5, window_bounds = array<i64: 1, 128>}, {transform_indices = @transform_6, window_bounds = array<i64: 16, 1>}, {transform_indices = @transform_7, window_bounds = array<i64: 16, 1>}, {transform_indices = @transform_8, window_bounds = array<i64: 16, 1>}, {transform_indices = @transform_9, window_bounds = array<i64: 16, 128>}, {pipeline_mode = #tpu.pipeline_mode<synchronous>, transform_indices = @transform_10, window_bounds = array<i64: 1, 128>}]} {
    %c0_i32 = arith.constant 0 : i32
    %0 = arith.cmpi eq, %arg0, %c0_i32 : i32
    %1 = arith.extui %0 : i1 to i32
    %c0_i32_0 = arith.constant 0 : i32
    %2 = arith.cmpi ne, %1, %c0_i32_0 : i32
    scf.if %2 {
      %cst_41 = arith.constant 0.000000e+00 : f32
      %101 = vector.broadcast %cst_41 : f32 to vector<1x128xf32>
      %c0_42 = arith.constant 0 : index
      %c0_43 = arith.constant 0 : index
      %102 = vector.load %arg12[%c0_42, %c0_43] : memref<1x128xf32, #tpu.memory_space<vmem>>, vector<1x128xf32>
      tpu.vector_store %arg12[%c0_42, %c0_43], %101 {strides = array<i32>} : memref<1x128xf32, #tpu.memory_space<vmem>>, vector<1x128xf32>,
    } else {
    }
    %c0 = arith.constant 0 : index
    %3 = memref.load %arg1[%c0] : memref<2xf32, #tpu.memory_space<smem>>
    %c1 = arith.constant 1 : index
    %4 = memref.load %arg1[%c1] : memref<2xf32, #tpu.memory_space<smem>>
    %c0_1 = arith.constant 0 : index
    %c0_2 = arith.constant 0 : index
    %5 = vector.load %arg2[%c0_1, %c0_2] : memref<16x32xf32, #tpu.memory_space<vmem>>, vector<16x32xf32>
    %c0_3 = arith.constant 0 : index
    %c0_4 = arith.constant 0 : index
    %6 = vector.load %arg3[%c0_3, %c0_4] : memref<32x16xf32, #tpu.memory_space<vmem>>, vector<32x16xf32>
    %cst = arith.constant dense<0.000000e+00> : vector<16x16xf32>
    %7 = tpu.matmul %5, %6, %cst {dimension_numbers = #tpu.dot_dimension_numbers<[1], [0], [0], [1], [0, 0, 1, 1], [], []>} : vector<16x32xf32>, vector<32x16xf32>, vector<16x16xf32> -> vector<16x16xf32>
    %c0_5 = arith.constant 0 : index
    %c0_6 = arith.constant 0 : index
    %8 = vector.load %arg4[%c0_5, %c0_6] : memref<1x16xf32, #tpu.memory_space<vmem>>, vector<1x16xf32>
    %9 = vector.broadcast %8 : vector<1x16xf32> to vector<16x16xf32>
    %10 = arith.addf %7, %9 : vector<16x16xf32>
    %cst_7 = arith.constant 0.000000e+00 : f32
    %11 = vector.broadcast %cst_7 : f32 to vector<16x16xf32>
    %12 = arith.subf %11, %10 : vector<16x16xf32>
    %13 = math.exp %12 : vector<16x16xf32>
    %cst_8 = arith.constant 1.000000e+00 : f32
    %14 = vector.broadcast %cst_8 : f32 to vector<16x16xf32>
    %15 = arith.addf %14, %13 : vector<16x16xf32>
    %16 = tpu.reciprocal %15 : vector<16x16xf32> -> vector<16x16xf32>
    %c0_9 = arith.constant 0 : index
    %c0_10 = arith.constant 0 : index
    %17 = vector.load %arg5[%c0_9, %c0_10] : memref<16x128xf32, #tpu.memory_space<vmem>>, vector<16x128xf32>
    %cst_11 = arith.constant dense<0.000000e+00> : vector<16x128xf32>
    %18 = tpu.matmul %16, %17, %cst_11 {dimension_numbers = #tpu.dot_dimension_numbers<[1], [0], [0], [1], [0, 0, 1, 1], [], []>} : vector<16x16xf32>, vector<16x128xf32>, vector<16x128xf32> -> vector<16x128xf32>
    %c0_12 = arith.constant 0 : index
    %c0_13 = arith.constant 0 : index
    %19 = vector.load %arg6[%c0_12, %c0_13] : memref<1x128xf32, #tpu.memory_space<vmem>>, vector<1x128xf32>
    %20 = vector.broadcast %19 : vector<1x128xf32> to vector<16x128xf32>
    %21 = arith.addf %18, %20 : vector<16x128xf32>
    %22 = tpu.iota {dimensions = array<i32: 1>} : vector<16x128xi32>
    %c8_i32 = arith.constant 8 : i32
    %23 = vector.broadcast %c8_i32 : i32 to vector<16x128xi32>
    %24 = arith.cmpi slt, %22, %23 : vector<16x128xi32>
    %cst_14 = arith.constant -1.000000e+30 : f32
    %25 = vector.broadcast %cst_14 : f32 to vector<16x128xf32>
    %26 = arith.select %24, %21, %25 : vector<16x128xi1>, vector<16x128xf32>
    %cst_15 = arith.constant dense<0xFF800000> : vector<16xf32>
    %27 = vector.multi_reduction <maximumf>, %26, %cst_15 [1] : vector<16x128xf32> to vector<16xf32>
    %28 = vector.shape_cast %27 : vector<16xf32> to vector<16x1xf32>
    %29 = vector.broadcast %28 : vector<16x1xf32> to vector<16x128xf32>
    %30 = arith.subf %26, %29 : vector<16x128xf32>
    %31 = math.exp %30 : vector<16x128xf32>
    %cst_16 = arith.constant dense<0.000000e+00> : vector<16xf32>
    %32 = vector.multi_reduction <add>, %31, %cst_16 [1] : vector<16x128xf32> to vector<16xf32>
    %33 = vector.shape_cast %32 : vector<16xf32> to vector<16x1xf32>
    %34 = math.log %33 : vector<16x1xf32>
    %35 = arith.addf %28, %34 : vector<16x1xf32>
    %36 = vector.broadcast %35 : vector<16x1xf32> to vector<16x128xf32>
    %37 = arith.subf %21, %36 : vector<16x128xf32>
    %38 = arith.select %24, %37, %21 : vector<16x128xi1>, vector<16x128xf32>
    %c0_17 = arith.constant 0 : index
    %c0_18 = arith.constant 0 : index
    %39 = vector.load %arg10[%c0_17, %c0_18] : memref<16x128xf32, #tpu.memory_space<vmem>>, vector<16x128xf32>
    tpu.vector_store %arg10[%c0_17, %c0_18], %38 {strides = array<i32>} : memref<16x128xf32, #tpu.memory_space<vmem>>, vector<16x128xf32>,
    %c0_19 = arith.constant 0 : index
    %c0_20 = arith.constant 0 : index
    %40 = vector.load %arg7[%c0_19, %c0_20] : memref<16x1xf32, #tpu.memory_space<vmem>>, vector<16x1xf32>
    %c0_21 = arith.constant 0 : index
    %c0_22 = arith.constant 0 : index
    %41 = vector.load %arg8[%c0_21, %c0_22] : memref<16x1xi32, #tpu.memory_space<vmem>>, vector<16x1xi32>
    %c0_23 = arith.constant 0 : index
    %c0_24 = arith.constant 0 : index
    %42 = vector.load %arg9[%c0_23, %c0_24] : memref<16x1xf32, #tpu.memory_space<vmem>>, vector<16x1xf32>
    %43 = vector.extract_strided_slice %21 {offsets = [0, 8], sizes = [16, 1], strides = [1, 1]} : vector<16x128xf32> to vector<16x1xf32>
    %44 = vector.broadcast %3 : f32 to vector<16x1xf32>
    %45 = arith.mulf %44, %40 : vector<16x1xf32>
    %46 = arith.addf %43, %45 : vector<16x1xf32>
    %47 = vector.broadcast %4 : f32 to vector<16x1xf32>
    %48 = arith.addf %46, %47 : vector<16x1xf32>
    %cst_25 = arith.constant 1.000000e+00 : f32
    %49 = arith.divf %cst_25, %3 : f32
    %50 = math.exp %48 : vector<16x1xf32>
    %51 = vector.broadcast %4 : f32 to vector<16x1xf32>
    %52 = arith.addf %43, %51 : vector<16x1xf32>
    %53 = math.exp %52 : vector<16x1xf32>
    %54 = arith.subf %50, %53 : vector<16x1xf32>
    %55 = vector.broadcast %49 : f32 to vector<16x1xf32>
    %56 = arith.mulf %55, %54 : vector<16x1xf32>
    %57 = arith.subf %48, %56 : vector<16x1xf32>
    %58 = arith.mulf %57, %42 : vector<16x1xf32>
    %cst_26 = arith.constant dense<0.000000e+00> : vector<1xf32>
    %59 = vector.multi_reduction <add>, %58, %cst_26 [0] : vector<16x1xf32> to vector<1xf32>
    %60 = vector.shape_cast %59 : vector<1xf32> to vector<1x1xf32>
    %61 = vector.broadcast %41 : vector<16x1xi32> to vector<16x128xi32>
    %62 = arith.cmpi eq, %22, %61 : vector<16x128xi32>
    %cst_27 = arith.constant 0.000000e+00 : f32
    %63 = vector.broadcast %cst_27 : f32 to vector<16x128xf32>
    %64 = arith.select %62, %37, %63 : vector<16x128xi1>, vector<16x128xf32>
    %cst_28 = arith.constant dense<0.000000e+00> : vector<16xf32>
    %65 = vector.multi_reduction <add>, %64, %cst_28 [1] : vector<16x128xf32> to vector<16xf32>
    %66 = vector.shape_cast %65 : vector<16xf32> to vector<16x1xf32>
    %c-100_i32 = arith.constant -100 : i32
    %67 = vector.broadcast %c-100_i32 : i32 to vector<16x1xi32>
    %68 = arith.cmpi eq, %41, %67 : vector<16x1xi32>
    %cst_29 = arith.constant 0.000000e+00 : f32
    %69 = vector.broadcast %cst_29 : f32 to vector<16x1xf32>
    %70 = arith.subf %69, %66 : vector<16x1xf32>
    %cst_30 = arith.constant 0.000000e+00 : f32
    %71 = vector.broadcast %cst_30 : f32 to vector<16x1xf32>
    %72 = arith.select %68, %71, %70 : vector<16x1xi1>, vector<16x1xf32>
    %73 = arith.mulf %72, %42 : vector<16x1xf32>
    %cst_31 = arith.constant dense<0.000000e+00> : vector<1xf32>
    %74 = vector.multi_reduction <add>, %73, %cst_31 [0] : vector<16x1xf32> to vector<1xf32>
    %75 = vector.shape_cast %74 : vector<1xf32> to vector<1x1xf32>
    %cst_32 = arith.constant dense<0.000000e+00> : vector<1xf32>
    %76 = vector.multi_reduction <add>, %42, %cst_32 [0] : vector<16x1xf32> to vector<1xf32>
    %77 = vector.shape_cast %76 : vector<1xf32> to vector<1x1xf32>
    %78 = tpu.iota {dimensions = array<i32: 1>} : vector<1x128xi32>
    %c0_33 = arith.constant 0 : index
    %c0_34 = arith.constant 0 : index
    %79 = vector.load %arg12[%c0_33, %c0_34] : memref<1x128xf32, #tpu.memory_space<vmem>>, vector<1x128xf32>
    %c0_i32_35 = arith.constant 0 : i32
    %80 = vector.broadcast %c0_i32_35 : i32 to vector<1x128xi32>
    %81 = arith.cmpi eq, %78, %80 : vector<1x128xi32>
    %c1_i32 = arith.constant 1 : i32
    %82 = vector.broadcast %c1_i32 : i32 to vector<1x128xi32>
    %83 = arith.cmpi eq, %78, %82 : vector<1x128xi32>
    %c2_i32 = arith.constant 2 : i32
    %84 = vector.broadcast %c2_i32 : i32 to vector<1x128xi32>
    %85 = arith.cmpi eq, %78, %84 : vector<1x128xi32>
    %cst_36 = arith.constant 0.000000e+00 : f32
    %86 = vector.shape_cast %77 : vector<1x1xf32> to vector<1x1xf32>
    %87 = vector.broadcast %86 : vector<1x1xf32> to vector<1x128xf32>
    %88 = vector.broadcast %cst_36 : f32 to vector<1x128xf32>
    %89 = arith.select %85, %87, %88 : vector<1x128xi1>, vector<1x128xf32>
    %90 = vector.shape_cast %75 : vector<1x1xf32> to vector<1x1xf32>
    %91 = vector.broadcast %90 : vector<1x1xf32> to vector<1x128xf32>
    %92 = arith.select %83, %91, %89 : vector<1x128xi1>, vector<1x128xf32>
    %93 = vector.shape_cast %60 : vector<1x1xf32> to vector<1x1xf32>
    %94 = vector.broadcast %93 : vector<1x1xf32> to vector<1x128xf32>
    %95 = arith.select %81, %94, %92 : vector<1x128xi1>, vector<1x128xf32>
    %96 = arith.addf %79, %95 : vector<1x128xf32>
    %c0_37 = arith.constant 0 : index
    %c0_38 = arith.constant 0 : index
    %97 = vector.load %arg12[%c0_37, %c0_38] : memref<1x128xf32, #tpu.memory_space<vmem>>, vector<1x128xf32>
    tpu.vector_store %arg12[%c0_37, %c0_38], %96 {strides = array<i32>} : memref<1x128xf32, #tpu.memory_space<vmem>>, vector<1x128xf32>,
    %c0_i32_39 = arith.constant 0 : i32
    %98 = arith.cmpi eq, %arg0, %c0_i32_39 : i32
    %99 = arith.extui %98 : i1 to i32
    %c0_i32_40 = arith.constant 0 : i32
    %100 = arith.cmpi ne, %99, %c0_i32_40 : i32
    scf.if %100 {
      %c0_41 = arith.constant 0 : index
      %c0_42 = arith.constant 0 : index
      %101 = vector.load %arg12[%c0_41, %c0_42] : memref<1x128xf32, #tpu.memory_space<vmem>>, vector<1x128xf32>
      %102 = vector.extract_strided_slice %101 {offsets = [0, 0], sizes = [1, 1], strides = [1, 1]} : vector<1x128xf32> to vector<1x1xf32>
      %103 = vector.extract_strided_slice %101 {offsets = [0, 1], sizes = [1, 1], strides = [1, 1]} : vector<1x128xf32> to vector<1x1xf32>
      %104 = vector.extract_strided_slice %101 {offsets = [0, 2], sizes = [1, 1], strides = [1, 1]} : vector<1x128xf32> to vector<1x1xf32>
      %105 = tpu.reciprocal %104 : vector<1x1xf32> -> vector<1x1xf32>
      %cst_43 = arith.constant 0.000000e+00 : f32
      %106 = vector.broadcast %cst_43 : f32 to vector<1x1xf32>
      %107 = arith.subf %106, %102 : vector<1x1xf32>
      %108 = arith.mulf %107, %105 : vector<1x1xf32>
      %109 = arith.mulf %103, %105 : vector<1x1xf32>
      %110 = arith.addf %108, %109 : vector<1x1xf32>
      %c0_i32_44 = arith.constant 0 : i32
      %111 = vector.broadcast %c0_i32_44 : i32 to vector<1x128xi32>
      %112 = arith.cmpi eq, %78, %111 : vector<1x128xi32>
      %c1_i32_45 = arith.constant 1 : i32
      %113 = vector.broadcast %c1_i32_45 : i32 to vector<1x128xi32>
      %114 = arith.cmpi eq, %78, %113 : vector<1x128xi32>
      %c2_i32_46 = arith.constant 2 : i32
      %115 = vector.broadcast %c2_i32_46 : i32 to vector<1x128xi32>
      %116 = arith.cmpi eq, %78, %115 : vector<1x128xi32>
      %cst_47 = arith.constant 0.000000e+00 : f32
      %117 = vector.shape_cast %110 : vector<1x1xf32> to vector<1x1xf32>
      %118 = vector.broadcast %117 : vector<1x1xf32> to vector<1x128xf32>
      %119 = vector.broadcast %cst_47 : f32 to vector<1x128xf32>
      %120 = arith.select %116, %118, %119 : vector<1x128xi1>, vector<1x128xf32>
      %121 = vector.shape_cast %109 : vector<1x1xf32> to vector<1x1xf32>
      %122 = vector.broadcast %121 : vector<1x1xf32> to vector<1x128xf32>
      %123 = arith.select %114, %122, %120 : vector<1x128xi1>, vector<1x128xf32>
      %124 = vector.shape_cast %108 : vector<1x1xf32> to vector<1x1xf32>
      %125 = vector.broadcast %124 : vector<1x1xf32> to vector<1x128xf32>
      %126 = arith.select %112, %125, %123 : vector<1x128xi1>, vector<1x128xf32>
      %c0_48 = arith.constant 0 : index
      %c0_49 = arith.constant 0 : index
      %127 = vector.load %arg11[%c0_48, %c0_49] : memref<1x128xf32, #tpu.memory_space<vmem>>, vector<1x128xf32>
      tpu.vector_store %arg11[%c0_48, %c0_49], %126 {strides = array<i32>} : memref<1x128xf32, #tpu.memory_space<vmem>>, vector<1x128xf32>,
    } else {
    }
    return
  }
  func.func @transform_0(%arg0: i32) -> i32 {
    %c0_i32 = arith.constant 0 : i32
    %c0_i32_0 = arith.constant 0 : i32
    return %c0_i32 : i32
  }
  func.func @transform_1(%arg0: i32) -> (i32, i32) {
    %c0_i32 = arith.constant 0 : i32
    %c0_i32_0 = arith.constant 0 : i32
    return %arg0, %c0_i32 : i32, i32
  }
  func.func @transform_2(%arg0: i32) -> (i32, i32) {
    %c0_i32 = arith.constant 0 : i32
    %c0_i32_0 = arith.constant 0 : i32
    %c0_i32_1 = arith.constant 0 : i32
    return %c0_i32, %c0_i32_0 : i32, i32
  }
  func.func @transform_3(%arg0: i32) -> (i32, i32) {
    %c0_i32 = arith.constant 0 : i32
    %c0_i32_0 = arith.constant 0 : i32
    %c0_i32_1 = arith.constant 0 : i32
    return %c0_i32, %c0_i32_0 : i32, i32
  }
  func.func @transform_4(%arg0: i32) -> (i32, i32) {
    %c0_i32 = arith.constant 0 : i32
    %c0_i32_0 = arith.constant 0 : i32
    %c0_i32_1 = arith.constant 0 : i32
    return %c0_i32, %c0_i32_0 : i32, i32
  }
  func.func @transform_5(%arg0: i32) -> (i32, i32) {
    %c0_i32 = arith.constant 0 : i32
    %c0_i32_0 = arith.constant 0 : i32
    %c0_i32_1 = arith.constant 0 : i32
    return %c0_i32, %c0_i32_0 : i32, i32
  }
  func.func @transform_6(%arg0: i32) -> (i32, i32) {
    %c0_i32 = arith.constant 0 : i32
    %c0_i32_0 = arith.constant 0 : i32
    return %arg0, %c0_i32 : i32, i32
  }
  func.func @transform_7(%arg0: i32) -> (i32, i32) {
    %c0_i32 = arith.constant 0 : i32
    %c0_i32_0 = arith.constant 0 : i32
    return %arg0, %c0_i32 : i32, i32
  }
  func.func @transform_8(%arg0: i32) -> (i32, i32) {
    %c0_i32 = arith.constant 0 : i32
    %c0_i32_0 = arith.constant 0 : i32
    return %arg0, %c0_i32 : i32, i32
  }
  func.func @transform_9(%arg0: i32) -> (i32, i32) {
    %c0_i32 = arith.constant 0 : i32
    %c0_i32_0 = arith.constant 0 : i32
    return %arg0, %c0_i32 : i32, i32
  }
  func.func @transform_10(%arg0: i32) -> (i32, i32) {
    %c0_i32 = arith.constant 0 : i32
    %c0_i32_0 = arith.constant 0 : i32
    %c0_i32_1 = arith.constant 0 : i32
    return %c0_i32, %c0_i32_0 : i32, i32
  }
}

</mosaic_0001>

<llo_original>
// kernel: rmtpp_forward_and_loss.1
$region0: #{rmtpp_forward_and_loss.1}
  #allocation0 [shape = 'u32[]', space=smem, size = 0x4, offset = 0x4, fixed_abs, tag = 'smem constant byte address 0x4 - core index']
  #allocation1 [shape = 'u32[144,128]{1,0:T(1,128)}', space=vmem, size = 0x12000, scoped, tag = 'internal scratch']
  #allocation2 [shape = 'f32[1,128]{1,0:T(1,128)}', space=vmem, size = 0x200, scoped, tag = 'scratch operand']
  %s0 = inlined_call_operand.vmem [shape: f32[2], index: 0, kind: input, shape index: {}]
  %s1 = inlined_call_operand.vmem [shape: f32[16,32], index: 1, kind: input, shape index: {}]
  %s2 = inlined_call_operand.vmem [shape: f32[32,16], index: 2, kind: input, shape index: {}]
  %s3 = inlined_call_operand.vmem [shape: f32[1,16], index: 3, kind: input, shape index: {}]
  %s4 = inlined_call_operand.vmem [shape: f32[16,128], index: 4, kind: input, shape index: {}]
  %s5 = inlined_call_operand.vmem [shape: f32[1,128], index: 5, kind: input, shape index: {}]
  %s6 = inlined_call_operand.vmem [shape: f32[16,1], index: 6, kind: input, shape index: {}]
  %s7 = inlined_call_operand.vmem [shape: s32[16,1], index: 7, kind: input, shape index: {}]
  %s8 = inlined_call_operand.vmem [shape: f32[16,1], index: 8, kind: input, shape index: {}]
  %s9 = inlined_call_operand.vmem [shape: f32[16,128], index: 9, kind: output, shape index: {0}]
  %s10 = inlined_call_operand.vmem [shape: f32[1,128], index: 10, kind: output, shape index: {1}]
  %11 = xla_tuple %s9, %s10
  %s12 = sld [smem:[#allocation0]]
  $region66: #{rmtpp_forward_and_loss.1} parent=0
    _
  %s14 = ssub.s32 1, %s12
  %s15 = scalar_select 0, %s14, %s12
  $region1: #{rmtpp_forward_and_loss.1} parent=0
    #allocation3 [shape = 'u8[512]{0}', space=smem, size = 0x200, scoped, tag = 'input window, operand 0, single buffered']
    #allocation4 [shape = 's32[1]{0}', space=sflag, size = 0x4, scoped, tag = 'scoped memory for rmtpp_forward_and_loss.1']
    %16 = vsyncpa [#allocation4], 0
    // Predicated region
    $region2: #{rmtpp_forward_and_loss.1} parent=1 // pred_check
      _
    $region3: #{rmtpp_forward_and_loss.1} parent=1 // pred_check_branch
      %18 = sbr.rel (0) target = $region5
    $region4: #{rmtpp_forward_and_loss.1} parent=1 // pred_region
      %s20 = ssub.s32 16, 16
      %21 = vsyncadd [#allocation4], %s20
      %s23 = sshll.u32 %s0, 4
      %s24 = int_to_ptr.vmem [resolvable:$true] %s23
      %26 = dma.vmem_to_smem %s24, 16, [#allocation3], [#allocation4]
    $region5: #{rmtpp_forward_and_loss.1} parent=1 // pred_fallthru
      _
    // Predicated region
    $region6: #{rmtpp_forward_and_loss.1} parent=1 // pred_check
      _
    $region7: #{rmtpp_forward_and_loss.1} parent=1 // pred_check_branch
      %28 = sbr.rel (0) target = $region9
    $region8: #{rmtpp_forward_and_loss.1} parent=1 // pred_region
      _
    $region9: #{rmtpp_forward_and_loss.1} parent=1 // pred_fallthru
      _
    // Predicated region
    $region10: #{rmtpp_forward_and_loss.1} parent=1 // pred_check
      _
    $region11: #{rmtpp_forward_and_loss.1} parent=1 // pred_check_branch
      %30 = sbr.rel (0) target = $region13
    $region12: #{rmtpp_forward_and_loss.1} parent=1 // pred_region
      _
    $region13: #{rmtpp_forward_and_loss.1} parent=1 // pred_fallthru
      _
    // Predicated region
    $region14: #{rmtpp_forward_and_loss.1} parent=1 // pred_check
      _
    $region15: #{rmtpp_forward_and_loss.1} parent=1 // pred_check_branch
      %32 = sbr.rel (0) target = $region17
    $region16: #{rmtpp_forward_and_loss.1} parent=1 // pred_region
      _
    $region17: #{rmtpp_forward_and_loss.1} parent=1 // pred_fallthru
      _
    // Predicated region
    $region18: #{rmtpp_forward_and_loss.1} parent=1 // pred_check
      _
    $region19: #{rmtpp_forward_and_loss.1} parent=1 // pred_check_branch
      %34 = sbr.rel (0) target = $region21
    $region20: #{rmtpp_forward_and_loss.1} parent=1 // pred_region
      _
    $region21: #{rmtpp_forward_and_loss.1} parent=1 // pred_fallthru
      _
    // Predicated region
    $region22: #{rmtpp_forward_and_loss.1} parent=1 // pred_check
      _
    $region23: #{rmtpp_forward_and_loss.1} parent=1 // pred_check_branch
      %36 = sbr.rel (0) target = $region25
    $region24: #{rmtpp_forward_and_loss.1} parent=1 // pred_region
      _
    $region25: #{rmtpp_forward_and_loss.1} parent=1 // pred_fallthru
      _
    // Predicated region
    $region26: #{rmtpp_forward_and_loss.1} parent=1 // pred_check
      _
    $region27: #{rmtpp_forward_and_loss.1} parent=1 // pred_check_branch
      %38 = sbr.rel (0) target = $region29
    $region28: #{rmtpp_forward_and_loss.1} parent=1 // pred_region
      _
    $region29: #{rmtpp_forward_and_loss.1} parent=1 // pred_fallthru
      _
    // Predicated region
    $region30: #{rmtpp_forward_and_loss.1} parent=1 // pred_check
      _
    $region31: #{rmtpp_forward_and_loss.1} parent=1 // pred_check_branch
      %40 = sbr.rel (0) target = $region33
    $region32: #{rmtpp_forward_and_loss.1} parent=1 // pred_region
      _
    $region33: #{rmtpp_forward_and_loss.1} parent=1 // pred_fallthru
      _
    // Predicated region
    $region34: #{rmtpp_forward_and_loss.1} parent=1 // pred_check
      _
    $region35: #{rmtpp_forward_and_loss.1} parent=1 // pred_check_branch
      %42 = sbr.rel (0) target = $region37
    $region36: #{rmtpp_forward_and_loss.1} parent=1 // pred_region
      _
    $region37: #{rmtpp_forward_and_loss.1} parent=1 // pred_fallthru
      _
    // Predicated region
    $region38: #{rmtpp_forward_and_loss.1} parent=1 // pred_check
      _
    $region39: #{rmtpp_forward_and_loss.1} parent=1 // pred_check_branch
      %44 = sbr.rel (0) target = $region41
    $region40: #{rmtpp_forward_and_loss.1} parent=1 // pred_region
      %45 = dma.done [#allocation4], 16
    $region41: #{rmtpp_forward_and_loss.1} parent=1 // pred_fallthru
      _
    %46 = sfence
    %p47 = scmp.eq.s32.totalorder 0, 0
    // Predicated region
    $region42: #{rmtpp_forward_and_loss.1} parent=1 // pred_check
      %p48 = pneg %p47
    $region43: #{rmtpp_forward_and_loss.1} parent=1 // pred_check_branch
      %50 = sbr.rel (%p48) target = $region45
    $region44: #{rmtpp_forward_and_loss.1} parent=1 // pred_region
      %51 = vst [vmem:[#allocation2] sm:$0x1] 0.0
    $region45: #{rmtpp_forward_and_loss.1} parent=1 // pred_fallthru
      _
    %s52 = sld [smem:[#allocation3]]
    %s53 = sld [smem:[#allocation3 + $0x1]]
    %v54 = vld [vmem:[%s1] sm:$0xff]
    %v55 = vld [vmem:[%s1 + $0x8] sm:$0xff]
    %v56 = vld [vmem:[%s2] sm:$0xff]
    %v57 = vld [vmem:[%s2 + $0x8] sm:$0xff]
    %v58 = vld [vmem:[%s2 + $0x10] sm:$0xff]
    %v59 = vld [vmem:[%s2 + $0x18] sm:$0xff]
    %v60 = vld [vmem:[%s3] sm:$0x1]
    %v62 = vlaneseq
    %v63 = vshrl.u32 %v62, 7
    %v64 = vsub.s32 0, %v63
    %v65 = vrot.slane %v60, %v64
    %vm67 = vcmask 261120
    %v69 = vsel %vm67, %v54, 0
    %v72 = vsel %vm67, %v55, 0
    %74 = vmatprep.subr.mxu0 0.0
    %75 = vmatpush1.msra.mxu0 %v56
    %76 = vmatprep.subr.mxu0 0.0
    %77 = vmatpush1.msra.mxu0 %v57
    %78 = vmatprep.subr.mxu0 0.0
    %79 = vmatpush1.msra.mxu0 %v58
    %80 = vmatprep.subr.mxu0 0.0
    %81 = vmatpush1.msra.mxu0 %v59
    %82 = vmatprep.subr.mxu0 0.0
    %83 = vmatpush1.msra.mxu0 0.0
    %84 = vmatprep.subr.mxu0 0.0
    %85 = vmatpush1.msra.mxu0 0.0
    %86 = vmatprep.subr.mxu0 0.0
    %87 = vmatpush1.msra.mxu0 0.0
    %88 = vmatprep.subr.mxu0 0.0
    %89 = vmatpush1.msra.mxu0 0.0
    %90 = vmatprep.subr.mxu0 0.0
    %91 = vmatpush1.msra.mxu0 0.0
    %92 = vmatprep.subr.mxu0 0.0
    %93 = vmatpush1.msra.mxu0 0.0
    %94 = vmatprep.subr.mxu0 0.0
    %95 = vmatpush1.msra.mxu0 0.0
    %96 = vmatprep.subr.mxu0 0.0
    %97 = vmatpush1.msra.mxu0 0.0
    %98 = vmatprep.subr.mxu0 0.0
    %99 = vmatpush1.msra.mxu0 0.0
    %100 = vmatprep.subr.mxu0 0.0
    %101 = vmatpush1.msra.mxu0 0.0
    %102 = vmatprep.subr.mxu0 0.0
    %103 = vmatpush1.msra.mxu0 0.0
    %104 = vmatprep.subr.mxu0 0.0
    %105 = vmatpush1.msra.mxu0 0.0
    %106 = vmatprep.subr.mxu0 0.0
    %107 = vmatpush1.msra.mxu0 0.0
    %108 = vmatprep.subr.mxu0 0.0
    %109 = vmatpush1.msra.mxu0 0.0
    %110 = vmatprep.subr.mxu0 0.0
    %111 = vmatpush1.msra.mxu0 0.0
    %112 = vmatprep.subr.mxu0 0.0
    %113 = vmatpush1.msra.mxu0 0.0
    %114 = vmatprep.subr.mxu0 0.0
    %115 = vmatpush1.msra.mxu0 0.0
    %116 = vmatprep.subr.mxu0 0.0
    %117 = vmatpush1.msra.mxu0 0.0
    %118 = vmatprep.subr.mxu0 0.0
    %119 = vmatpush1.msra.mxu0 0.0
    %120 = vmatprep.subr.mxu0 0.0
    %121 = vmatpush1.msra.mxu0 0.0
    %122 = vmatprep.subr.mxu0 0.0
    %123 = vmatpush1.msra.mxu0 0.0
    %124 = vmatprep.subr.mxu0 0.0
    %125 = vmatpush1.msra.mxu0 0.0
    %126 = vmatprep.subr.mxu0 0.0
    %127 = vmatpush1.msra.mxu0 0.0
    %128 = vmatprep.subr.mxu0 0.0
    %129 = vmatpush1.msra.mxu0 0.0
    %130 = vmatprep.subr.mxu0 0.0
    %131 = vmatpush1.msra.mxu0 0.0
    %132 = vmatprep.subr.mxu0 0.0
    %133 = vmatpush1.msra.mxu0 0.0
    %134 = vmatprep.subr.mxu0 0.0
    %135 = vmatpush1.msra.mxu0 0.0
    %136 = vmatprep.subr.mxu0 0.0
    %137 = vmatpush1.msra.mxu0 0.0
    %138 = vmatprep.mubr.f32.mxu0 0.0
    %139 = vmatmul.mubr.f32.gmra.mrb[0].mxu0 %v69
    %v140 = vpop.f32.mrb[0].mxu0
    %v141 = vadd.f32 %v65, %v140
    %v142 = vpop.f32.mrb[0].mxu0
    %143 = vmatprep.mubr.f32.mxu0 0.0
    %144 = vmatmul.mubr.f32.gmra.mrb[0].mxu0 %v72
    %v145 = vpop.f32.mrb[0].mxu0
    %v146 = vadd.f32 %v65, %v145
    %v147 = vpop.f32.mrb[0].mxu0
    %148 = vdwg.mxu0
    %v149 = vsub.f32 0.0, %v141
    %v150 = vsub.f32 0.0, %v146
    %v151 = vmul.f32 %v149, 1.442695
    %v152 = vpow.pop %v151
    %v153 = vmul.f32 %v150, 1.442695
    %v154 = vpow.pop %v153
    %v155 = vadd.f32 %v152, 1.0
    %v156 = vadd.f32 %v154, 1.0
    %v157 = vrcp.pop %v155
    %v158 = vrcp.pop %v156
    %v159 = vld [vmem:[%s4] sm:$0xff]
    %v160 = vld [vmem:[%s4 + $0x8] sm:$0xff]
    %v161 = vld [vmem:[%s5] sm:$0x1]
    %v163 = vlaneseq
    %v164 = vshrl.u32 %v163, 7
    %v165 = vsub.s32 0, %v164
    %v166 = vrot.slane %v161, %v165
    %vm168 = vcmask 130048
    %v170 = vsel %vm168, %v157, 0
    %v173 = vsel %vm168, %v158, 0
    %175 = vmatprep.subr.mxu0 0.0
    %176 = vmatpush1.msra.mxu0 %v159
    %177 = vmatprep.subr.mxu0 0.0
    %178 = vmatpush1.msra.mxu0 %v160
    %179 = vmatprep.subr.mxu0 0.0
    %180 = vmatpush1.msra.mxu0 0.0
    %181 = vmatprep.subr.mxu0 0.0
    %182 = vmatpush1.msra.mxu0 0.0
    %183 = vmatprep.subr.mxu0 0.0
    %184 = vmatpush1.msra.mxu0 0.0
    %185 = vmatprep.subr.mxu0 0.0
    %186 = vmatpush1.msra.mxu0 0.0
    %187 = vmatprep.subr.mxu0 0.0
    %188 = vmatpush1.msra.mxu0 0.0
    %189 = vmatprep.subr.mxu0 0.0
    %190 = vmatpush1.msra.mxu0 0.0
    %191 = vmatprep.subr.mxu0 0.0
    %192 = vmatpush1.msra.mxu0 0.0
    %193 = vmatprep.subr.mxu0 0.0
    %194 = vmatpush1.msra.mxu0 0.0
    %195 = vmatprep.subr.mxu0 0.0
    %196 = vmatpush1.msra.mxu0 0.0
    %197 = vmatprep.subr.mxu0 0.0
    %198 = vmatpush1.msra.mxu0 0.0
    %199 = vmatprep.subr.mxu0 0.0
    %200 = vmatpush1.msra.mxu0 0.0
    %201 = vmatprep.subr.mxu0 0.0
    %202 = vmatpush1.msra.mxu0 0.0
    %203 = vmatprep.subr.mxu0 0.0
    %204 = vmatpush1.msra.mxu0 0.0
    %205 = vmatprep.subr.mxu0 0.0
    %206 = vmatpush1.msra.mxu0 0.0
    %207 = vmatprep.subr.mxu0 0.0
    %208 = vmatpush1.msra.mxu0 0.0
    %209 = vmatprep.subr.mxu0 0.0
    %210 = vmatpush1.msra.mxu0 0.0
    %211 = vmatprep.subr.mxu0 0.0
    %212 = vmatpush1.msra.mxu0 0.0
    %213 = vmatprep.subr.mxu0 0.0
    %214 = vmatpush1.msra.mxu0 0.0
    %215 = vmatprep.subr.mxu0 0.0
    %216 = vmatpush1.msra.mxu0 0.0
    %217 = vmatprep.subr.mxu0 0.0
    %218 = vmatpush1.msra.mxu0 0.0
    %219 = vmatprep.subr.mxu0 0.0
    %220 = vmatpush1.msra.mxu0 0.0
    %221 = vmatprep.subr.mxu0 0.0
    %222 = vmatpush1.msra.mxu0 0.0
    %223 = vmatprep.subr.mxu0 0.0
    %224 = vmatpush1.msra.mxu0 0.0
    %225 = vmatprep.subr.mxu0 0.0
    %226 = vmatpush1.msra.mxu0 0.0
    %227 = vmatprep.subr.mxu0 0.0
    %228 = vmatpush1.msra.mxu0 0.0
    %229 = vmatprep.subr.mxu0 0.0
    %230 = vmatpush1.msra.mxu0 0.0
    %231 = vmatprep.subr.mxu0 0.0
    %232 = vmatpush1.msra.mxu0 0.0
    %233 = vmatprep.subr.mxu0 0.0
    %234 = vmatpush1.msra.mxu0 0.0
    %235 = vmatprep.subr.mxu0 0.0
    %236 = vmatpush1.msra.mxu0 0.0
    %237 = vmatprep.subr.mxu0 0.0
    %238 = vmatpush1.msra.mxu0 0.0
    %239 = vmatprep.mubr.f32.mxu0 0.0
    %240 = vmatmul.mubr.f32.gmra.mrb[0].mxu0 %v170
    %v241 = vpop.f32.mrb[0].mxu0
    %v242 = vadd.f32 %v166, %v241
    %v243 = vpop.f32.mrb[0].mxu0
    %244 = vmatprep.mubr.f32.mxu0 0.0
    %245 = vmatmul.mubr.f32.gmra.mrb[0].mxu0 %v173
    %v246 = vpop.f32.mrb[0].mxu0
    %v247 = vadd.f32 %v166, %v246
    %v248 = vpop.f32.mrb[0].mxu0
    %249 = vdwg.mxu0
    %v250 = vlaneseq
    %v251 = vand.u32 %v250, 127
    %vm252 = vcmp.lt.s32.totalorder %v251, 8
    %v253 = vsel %vm252, %v242, -1e+30
    %v254 = vsel %vm252, %v247, -1e+30
    %255 = vmax.xlane.f32.xlu0 %v253
    %v256 = vpop.xlane.xlu0 %255
    %257 = vmax.xlane.f32.xlu0 %v254
    %v258 = vpop.xlane.xlu0 %257
    %v259 = vsub.f32 %v253, %v256
    %v260 = vsub.f32 %v254, %v258
    %v261 = vmul.f32 %v259, 1.442695
    %v262 = vpow.pop %v261
    %v263 = vmul.f32 %v260, 1.442695
    %v264 = vpow.pop %v263
    %265 = vadd.xlane.f32.xlu0 %v262
    %v266 = vpop.xlane.xlu0 %265
    %267 = vadd.xlane.f32.xlu0 %v264
    %v268 = vpop.xlane.xlu0 %267
    %v269 = vlog2.pop %v266
    %v270 = vmul.f32 %v269, 0.6931472
    %v271 = vlog2.pop %v268
    %v272 = vmul.f32 %v271, 0.6931472
    %v273 = vadd.f32 %v256, %v270
    %v274 = vadd.f32 %v258, %v272
    %v275 = vsub.f32 %v242, %v273
    %v276 = vsub.f32 %v247, %v274
    %v277 = vsel %vm252, %v275, %v242
    %v278 = vsel %vm252, %v276, %v247
    %279 = vst [vmem:[%s9] sm:$0xff] %v277
    %280 = vst [vmem:[%s9 + $0x8] sm:$0xff] %v278
    %v281 = vld [vmem:[%s6] sm:$0xff]
    %v282 = vld [vmem:[%s6 + $0x8] sm:$0xff]
    %v283 = vld [vmem:[%s7] sm:$0xff]
    %v284 = vld [vmem:[%s7 + $0x8] sm:$0xff]
    %v285 = vld [vmem:[%s8] sm:$0xff]
    %v286 = vld [vmem:[%s8 + $0x8] sm:$0xff]
    %v287 = vstv %s52
    %v288 = vmul.f32 %v287, %v281
    %v289 = vmul.f32 %v287, %v282
    %292 = vrot.lane.b32.xlu0 %v288, 8
    %v293 = vpop.permute.xlu0 %292
    %294 = vrot.lane.b32.xlu0 %v289, 8
    %v295 = vpop.permute.xlu0 %294
    %v298 = vadd.f32 %v242, %v293
    %v299 = vadd.f32 %v247, %v295
    %v300 = vstv %s53
    %v301 = vadd.f32 %v298, %v300
    %v302 = vadd.f32 %v299, %v300
    %v303 = vstv %s52
    %v304 = vrcp.pop %v303
    %s305 = vtos %v304
    %v306 = vmul.f32 %v301, 1.442695
    %v307 = vpow.pop %v306
    %v308 = vmul.f32 %v302, 1.442695
    %v309 = vpow.pop %v308
    %v310 = vadd.f32 %v242, %v300
    %v311 = vadd.f32 %v247, %v300
    %v312 = vmul.f32 %v310, 1.442695
    %v313 = vpow.pop %v312
    %v314 = vmul.f32 %v311, 1.442695
    %v315 = vpow.pop %v314
    %v316 = vsub.f32 %v307, %v313
    %v317 = vsub.f32 %v309, %v315
    %v318 = vstv %s305
    %v319 = vmul.f32 %v318, %v316
    %v320 = vmul.f32 %v318, %v317
    %v321 = vsub.f32 %v301, %v319
    %v322 = vsub.f32 %v302, %v320
    %325 = vrot.lane.b32.xlu0 %v285, 8
    %v326 = vpop.permute.xlu0 %325
    %327 = vrot.lane.b32.xlu0 %v286, 8
    %v328 = vpop.permute.xlu0 %327
    %v331 = vmul.f32 %v321, %v326
    %v332 = vmul.f32 %v322, %v328
    %vm333 = vcmask 72768
    %v334 = vsel %vm333, %v331, 0.0
    %v335 = vsel %vm333, %v332, 0.0
    %v336 = vadd.f32 %v334, %v335
    %v337 = vrot.slane %v336, 4
    %v338 = vadd.f32 %v336, %v337
    %v339 = vrot.slane %v338, 2
    %v340 = vadd.f32 %v338, %v339
    %v341 = vrot.slane %v340, 1
    %v342 = vadd.f32 %v340, %v341
    %343 = vset.pattern.permute.xlu0 0
    %344 = vperm.xlu0 %343, %v283
    %v345 = vpop.permute.xlu0 %344
    %346 = vset.pattern.permute.xlu0 0
    %347 = vperm.xlu0 %346, %v284
    %v348 = vpop.permute.xlu0 %347
    %vm349 = vcmp.eq.s32.totalorder %v251, %v345
    %vm350 = vcmp.eq.s32.totalorder %v251, %v348
    %v351 = vsel %vm349, %v275, 0.0
    %v352 = vsel %vm350, %v276, 0.0
    %353 = vadd.xlane.f32.xlu0 %v351
    %v354 = vpop.xlane.xlu0 %353
    %355 = vadd.xlane.f32.xlu0 %v352
    %v356 = vpop.xlane.xlu0 %355
    %vm357 = vcmp.eq.s32.totalorder %v283, 4294967196
    %vm358 = vcmp.eq.s32.totalorder %v284, 4294967196
    %v359 = vsub.f32 0.0, %v354
    %v360 = vsub.f32 0.0, %v356
    %v361 = vsel %vm357, 0.0, %v359
    %v362 = vsel %vm358, 0.0, %v360
    %v363 = vmul.f32 %v361, %v285
    %v364 = vmul.f32 %v362, %v286
    %vm365 = vcmask 7168
    %v366 = vsel %vm365, %v363, 0.0
    %v367 = vsel %vm365, %v364, 0.0
    %v368 = vadd.f32 %v366, %v367
    %v369 = vrot.slane %v368, 4
    %v370 = vadd.f32 %v368, %v369
    %v371 = vrot.slane %v370, 2
    %v372 = vadd.f32 %v370, %v371
    %v373 = vrot.slane %v372, 1
    %v374 = vadd.f32 %v372, %v373
    %v375 = vsel %vm365, %v285, 0.0
    %v376 = vsel %vm365, %v286, 0.0
    %v377 = vadd.f32 %v375, %v376
    %v378 = vrot.slane %v377, 4
    %v379 = vadd.f32 %v377, %v378
    %v380 = vrot.slane %v379, 2
    %v381 = vadd.f32 %v379, %v380
    %v382 = vrot.slane %v381, 1
    %v383 = vadd.f32 %v381, %v382
    %v384 = vld [vmem:[#allocation2] sm:$0x1]
    %vm385 = vcmp.eq.s32.totalorder %v251, 0
    %vm386 = vcmp.eq.s32.totalorder %v251, 1
    %vm387 = vcmp.eq.s32.totalorder %v251, 2
    %389 = vset.pattern.permute.xlu0 0
    %390 = vperm.xlu0 %389, %v383
    %v391 = vpop.permute.xlu0 %390
    %v393 = vsel %vm387, %v391, 0.0
    %395 = vset.pattern.permute.xlu0 0
    %396 = vperm.xlu0 %395, %v374
    %v397 = vpop.permute.xlu0 %396
    %v399 = vsel %vm386, %v397, %v393
    %401 = vset.pattern.permute.xlu0 8
    %402 = vperm.xlu0 %401, %v342
    %v403 = vpop.permute.xlu0 %402
    %v405 = vsel %vm385, %v403, %v399
    %v406 = vadd.f32 %v384, %v405
    %407 = vst [vmem:[#allocation2] sm:$0x1] %v406
    // Predicated region
    $region46: #{rmtpp_forward_and_loss.1} parent=1 // pred_check
      %p408 = pneg %p47
    $region47: #{rmtpp_forward_and_loss.1} parent=1 // pred_check_branch
      %410 = sbr.rel (%p408) target = $region49
    $region48: #{rmtpp_forward_and_loss.1} parent=1 // pred_region
      %v411 = vld [vmem:[#allocation2] sm:$0x1]
      %v412 = vrcp.pop %v411
      %v413 = vsub.f32 0.0, %v411
      %415 = vrot.lane.b32.xlu0 %v412, 126
      %v416 = vpop.permute.xlu0 %415
      %v418 = vmul.f32 %v413, %v416
      %419 = vrot.lane.b32.xlu0 %v412, 127
      %v420 = vpop.permute.xlu0 %419
      %v422 = vmul.f32 %v411, %v420
      %424 = vrot.lane.b32.xlu0 %v422, 127
      %v425 = vpop.permute.xlu0 %424
      %v427 = vadd.f32 %v418, %v425
      %429 = vset.pattern.permute.xlu0 0
      %430 = vperm.xlu0 %429, %v427
      %v431 = vpop.permute.xlu0 %430
      %v433 = vlaneseq
      %v434 = vshrl.u32 %v433, 7
      %v435 = vsub.s32 0, %v434
      %v436 = vrot.slane %v431, %v435
      %v437 = vsel %vm387, %v436, 0.0
      %438 = vset.pattern.permute.xlu0 1
      %439 = vperm.xlu0 %438, %v422
      %v440 = vpop.permute.xlu0 %439
      %v442 = vlaneseq
      %v443 = vshrl.u32 %v442, 7
      %v444 = vsub.s32 0, %v443
      %v445 = vrot.slane %v440, %v444
      %v446 = vsel %vm386, %v445, %v437
      %448 = vset.pattern.permute.xlu0 0
      %449 = vperm.xlu0 %448, %v418
      %v450 = vpop.permute.xlu0 %449
      %v452 = vlaneseq
      %v453 = vshrl.u32 %v452, 7
      %v454 = vsub.s32 0, %v453
      %v455 = vrot.slane %v450, %v454
      %v456 = vsel %vm385, %v455, %v446
      %457 = vst [vmem:[%s10] sm:$0x1] %v456
    $region49: #{rmtpp_forward_and_loss.1} parent=1 // pred_fallthru
      _
    // Predicated region
    $region50: #{rmtpp_forward_and_loss.1} parent=1 // pred_check
      _
    $region51: #{rmtpp_forward_and_loss.1} parent=1 // pred_check_branch
      %459 = sbr.rel (0) target = $region53
    $region52: #{rmtpp_forward_and_loss.1} parent=1 // pred_region
      _
    $region53: #{rmtpp_forward_and_loss.1} parent=1 // pred_fallthru
      _
    // Predicated region
    $region54: #{rmtpp_forward_and_loss.1} parent=1 // pred_check
      _
    $region55: #{rmtpp_forward_and_loss.1} parent=1 // pred_check_branch
      %461 = sbr.rel (0) target = $region57
    $region56: #{rmtpp_forward_and_loss.1} parent=1 // pred_region
      _
    $region57: #{rmtpp_forward_and_loss.1} parent=1 // pred_fallthru
      _
    // Predicated region
    $region58: #{rmtpp_forward_and_loss.1} parent=1 // pred_check
      _
    $region59: #{rmtpp_forward_and_loss.1} parent=1 // pred_check_branch
      %463 = sbr.rel (0) target = $region61
    $region60: #{rmtpp_forward_and_loss.1} parent=1 // pred_region
      _
    $region61: #{rmtpp_forward_and_loss.1} parent=1 // pred_fallthru
      _
    // Predicated region
    $region62: #{rmtpp_forward_and_loss.1} parent=1 // pred_check
      _
    $region63: #{rmtpp_forward_and_loss.1} parent=1 // pred_check_branch
      %465 = sbr.rel (0) target = $region65
    $region64: #{rmtpp_forward_and_loss.1} parent=1 // pred_region
      _
    $region65: #{rmtpp_forward_and_loss.1} parent=1 // pred_fallthru
      _
    %466 = vsyncpa [#allocation4], 1

</llo_original>
